<compile_context>
chip_gen: v6e
topology: v6e:2x2x1
jax: 0.10.0
libtpu: 0.0.40
codegen_flags: <defaults>
</compile_context>

<pallas_src>
import jax
import jax.numpy as jnp
from jax.experimental import pallas as pl
from jax.experimental.pallas import tpu as pltpu


def _sigmoid_kernel(x_ref, o_ref):
    x = x_ref[...]
    # sigmoid(x) = 0.5 * tanh(0.5 * x) + 0.5  -> single EUP transcendental.
    o_ref[...] = 0.5 * jnp.tanh(0.5 * x) + 0.5


def sigmoid_pallas(x: jax.Array) -> jax.Array:
    """Element-wise sigmoid on an arbitrary-shaped tensor via a Pallas TPU kernel."""
    orig_shape = x.shape
    total = x.size

    # Elementwise op: any flattening order is valid. Prefer a sublane-dense
    # 2D slab (8 sublanes) so small arrays fill vregs instead of wasting 7/8
    # of each one.
    if total % 8 == 0:
        x2d = x.reshape(8, total // 8)
    else:
        x2d = x.reshape(1, total)

    out2d = pl.pallas_call(
        _sigmoid_kernel,
        out_shape=jax.ShapeDtypeStruct(x2d.shape, x2d.dtype),
        # Whole array as a single VMEM block: no grid, no pipelining scaffolding.
        in_specs=[pl.BlockSpec(memory_space=pltpu.MemorySpace.VMEM)],
        out_specs=pl.BlockSpec(memory_space=pltpu.MemorySpace.VMEM),
    )(x2d)

    return out2d.reshape(orig_shape)


if __name__ == "__main__":
    key = jax.random.PRNGKey(0)
    # Shape implied by the module's forward: [1, 960, 1, 1] (NCHW).
    x = jax.random.normal(key, (1, 960, 1, 1), dtype=jnp.float32)

    y = sigmoid_pallas(x)
    jax.block_until_ready(y)

    # Sanity check against plain JAX reference.
    y_ref = jax.nn.sigmoid(x)
    assert y.shape == x.shape and y.dtype == x.dtype
    assert jnp.max(jnp.abs(y - y_ref)) < 1e-6

    print("KERNEL_OK")
</pallas_src>

<mosaic_0001>
module attributes {stable_mosaic.version = 11 : i64} {
  func.func @_sigmoid_kernel(%arg0: memref<8x120xf32, #tpu.memory_space<vmem>>, %arg1: memref<8x120xf32, #tpu.memory_space<vmem>>) attributes {dimension_semantics = [], scalar_prefetch = 0 : i64, scratch_operands = 0 : i64, tpu.core_type = #tpu.core_type<tc>} {
    %c0 = arith.constant 0 : index
    %c0_0 = arith.constant 0 : index
    %0 = vector.load %arg0[%c0, %c0_0] : memref<8x120xf32, #tpu.memory_space<vmem>>, vector<8x120xf32>
    %cst = arith.constant 5.000000e-01 : f32
    %1 = vector.broadcast %cst : f32 to vector<8x120xf32>
    %2 = arith.mulf %1, %0 : vector<8x120xf32>
    %3 = math.tanh %2 : vector<8x120xf32>
    %cst_1 = arith.constant 5.000000e-01 : f32
    %4 = vector.broadcast %cst_1 : f32 to vector<8x120xf32>
    %5 = arith.mulf %4, %3 : vector<8x120xf32>
    %cst_2 = arith.constant 5.000000e-01 : f32
    %6 = vector.broadcast %cst_2 : f32 to vector<8x120xf32>
    %7 = arith.addf %5, %6 : vector<8x120xf32>
    %c0_3 = arith.constant 0 : index
    %c0_4 = arith.constant 0 : index
    %8 = vector.load %arg1[%c0_3, %c0_4] : memref<8x120xf32, #tpu.memory_space<vmem>>, vector<8x120xf32>
    tpu.vector_store %arg1[%c0_3, %c0_4], %7 {strides = array<i32>} : memref<8x120xf32, #tpu.memory_space<vmem>>, vector<8x120xf32>,
    return
  }
}

</mosaic_0001>

<llo_original>
// kernel: tpu_custom_call.1
$region0: #{tpu_custom_call.1}
  #allocation0 [shape = 'u32[]', space=smem, size = 0x4, offset = 0x4, fixed_abs, tag = 'smem constant byte address 0x4 - core index']
  #allocation1 [shape = 'u32[144,128]{1,0:T(1,128)}', space=vmem, size = 0x12000, scoped, tag = 'internal scratch']
  %s0 = inlined_call_operand.hbm [shape: f32[8,120], index: 0, kind: input, shape index: {}]
  %s1 = inlined_call_operand.hbm [shape: f32[8,120], index: 1, kind: output, shape index: {}]
  %s2 = sld [smem:[#allocation0]]
  $region18: #{tpu_custom_call.1} parent=0
    _
  %s4 = ssub.s32 1, %s2
  %s5 = scalar_select 0, %s4, %s2
  $region1: #{tpu_custom_call.1} parent=0
    #allocation2 [shape = 'u8[4096]{0}', space=vmem, size = 0x1000, scoped, tag = 'input window, operand 0, single buffered']
    #allocation3 [shape = 's32[1]{0}', space=sflag, size = 0x4, scoped, tag = 'scoped memory for tpu_custom_call.1']
    #allocation4 [shape = 's32[1]{0}', space=sflag, size = 0x4, scoped, tag = 'scoped memory for tpu_custom_call.1']
    #allocation5 [shape = 'u8[4096]{0}', space=vmem, size = 0x1000, scoped, tag = 'output window, operand 0, single buffered']
    %6 = vsyncpa [#allocation3], 0
    %7 = vsyncpa [#allocation4], 0
    // Predicated region
    $region2: #{tpu_custom_call.1} parent=1 // pred_check
      _
    $region3: #{tpu_custom_call.1} parent=1 // pred_check_branch
      %9 = sbr.rel (0) target = $region5
    $region4: #{tpu_custom_call.1} parent=1 // pred_region
      %s11 = ssub.s32 128, 128
      %12 = vsyncadd [#allocation3], %s11
      %s14 = sshll.u32 [#allocation2], 4
      %s15 = int_to_ptr.vmem [resolvable:$true] %s14
      %17 = dma.hbm_to_vmem [thread:$0]  %s0, 128, %s15, [#allocation3]
    $region5: #{tpu_custom_call.1} parent=1 // pred_fallthru
      _
    // Predicated region
    $region6: #{tpu_custom_call.1} parent=1 // pred_check
      _
    $region7: #{tpu_custom_call.1} parent=1 // pred_check_branch
      %19 = sbr.rel (0) target = $region9
    $region8: #{tpu_custom_call.1} parent=1 // pred_region
      %20 = dma.done [#allocation3], 128
    $region9: #{tpu_custom_call.1} parent=1 // pred_fallthru
      _
    %v21 = vld [vmem:[#allocation2] sm:$0xff]
    %v22 = vmul.f32 %v21, 0.5
    %v23 = vtanh.pop %v22
    %v24 = vmul.f32 %v23, 0.5
    %v25 = vadd.f32 %v24, 0.5
    %vm26 = vcmask 982016
    %27 = vst.msk [vmem:[#allocation5] sm:$0xff] %vm26, %v25
    // Predicated region
    $region10: #{tpu_custom_call.1} parent=1 // pred_check
      _
    $region11: #{tpu_custom_call.1} parent=1 // pred_check_branch
      %29 = sbr.rel (0) target = $region13
    $region12: #{tpu_custom_call.1} parent=1 // pred_region
      %s31 = ssub.s32 128, 128
      %32 = vsyncadd [#allocation4], %s31
      %s34 = sshll.u32 [#allocation5], 4
      %s35 = int_to_ptr.vmem [resolvable:$true] %s34
      %37 = dma.vmem_to_hbm [thread:$0]  %s35, 128, %s1, [#allocation4]
    $region13: #{tpu_custom_call.1} parent=1 // pred_fallthru
      _
    // Predicated region
    $region14: #{tpu_custom_call.1} parent=1 // pred_check
      _
    $region15: #{tpu_custom_call.1} parent=1 // pred_check_branch
      %39 = sbr.rel (0) target = $region17
    $region16: #{tpu_custom_call.1} parent=1 // pred_region
      %40 = dma.done [#allocation4], 128
    $region17: #{tpu_custom_call.1} parent=1 // pred_fallthru
      _
    %41 = vsyncpa [#allocation3], 1
    %42 = vsyncpa [#allocation4], 1

</llo_original>
